<compile_context>
chip_gen: v7x
topology: tpu7x:2x2x1
jax: 0.10.0
libtpu: 0.0.40
codegen_flags: <defaults>
</compile_context>

<pallas_src>
import numpy as np
from math import factorial
from collections import Counter

import jax
import jax.numpy as jnp
from jax import lax
from jax.experimental import pallas as pl
from jax.experimental.pallas import tpu as pltpu


# ----------------------------------------------------------------------------
# Clebsch-Gordan transformation rule (pure numpy port of the torch module init)
# ----------------------------------------------------------------------------

def check_l_consistency(l1, l2, l_output):
    if l_output < abs(l1 - l2) or l_output > l1 + l2:
        raise ValueError("l_output must be in between |l1 - l2| and (l1 + l2)")


def _compute_cg(l1, l2, l, m1, m2):
    # Racah formula for <l1 m1 l2 m2 | l (m1+m2)> (integer l's only).
    m = m1 + m2
    if abs(m1) > l1 or abs(m2) > l2 or abs(m) > l:
        return 0.0
    f = factorial
    pref = ((2 * l + 1) * f(l + l1 - l2) * f(l - l1 + l2) * f(l1 + l2 - l)
            / f(l1 + l2 + l + 1)) ** 0.5
    pref *= (f(l + m) * f(l - m) * f(l1 - m1) * f(l1 + m1)
             * f(l2 - m2) * f(l2 + m2)) ** 0.5
    s = 0.0
    for k in range(0, l1 + l2 - l + 1):
        args = [k, l1 + l2 - l - k, l1 - m1 - k, l2 + m2 - k,
                l - l2 + m1 + k, l - l1 - m2 + k]
        if any(a < 0 for a in args):
            continue
        s += (-1) ** k / (f(args[0]) * f(args[1]) * f(args[2])
                          * f(args[3]) * f(args[4]) * f(args[5]))
    return pref * s


class PartialClebschGordan:
    def __init__(self, l1, l2, l_output):
        self.values = np.zeros([2 * l1 + 1, 2 * l2 + 1])
        for m1 in range(-l1, l1 + 1):
            for m2 in range(-l2, l2 + 1):
                self.values[m1 + l1, m2 + l2] = _compute_cg(l1, l2, l_output, m1, m2)


def _compress(sequence, epsilon=1e-15):
    result = []
    for i in range(len(sequence)):
        m1, m2, multiplier = sequence[i][0], sequence[i][1], sequence[i][2]
        already = False
        for j in range(len(result)):
            if m1 == result[j][0] and m2 == result[j][1]:
                already = True
                break
        if not already:
            multiplier = 0.0
            for j in range(i, len(sequence)):
                if m1 == sequence[j][0] and m2 == sequence[j][1]:
                    multiplier += sequence[j][2]
            if np.abs(multiplier) > epsilon:
                result.append([m1, m2, multiplier])
    return result


def _get_conversion(l, m):
    if m < 0:
        X_re = [abs(m) + l, 1.0 / np.sqrt(2)]
        X_im = [m + l, -1.0 / np.sqrt(2)]
    if m == 0:
        X_re = [l, 1.0]
        X_im = [l, 0.0]
    if m > 0:
        if m % 2 == 0:
            X_re = [m + l, 1.0 / np.sqrt(2)]
            X_im = [-m + l, 1.0 / np.sqrt(2)]
        else:
            X_re = [m + l, -1.0 / np.sqrt(2)]
            X_im = [-m + l, -1.0 / np.sqrt(2)]
    return (X_re, X_im)


def _multiply(first, second, multiplier):
    return [first[0], second[0], first[1] * second[1] * multiplier]


def _multiply_sequence(sequence, multiplier):
    return [[el[0], el[1], el[2] * multiplier] for el in sequence]


def get_real_clebsch_gordan(clebsch, l1, l2, lambd):
    result = [[] for _ in range(2 * lambd + 1)]
    for mu in range(0, lambd + 1):
        real_now, imag_now = [], []
        for m2 in range(max(-l2, mu - l1), min(l2, mu + l1) + 1):
            m1 = mu - m2
            X1_re, X1_im = _get_conversion(l1, m1)
            X2_re, X2_im = _get_conversion(l2, m2)
            real_now.append(_multiply(X1_re, X2_re, clebsch[m1 + l1, m2 + l2]))
            real_now.append(_multiply(X1_im, X2_im, -clebsch[m1 + l1, m2 + l2]))
            imag_now.append(_multiply(X1_re, X2_im, clebsch[m1 + l1, m2 + l2]))
            imag_now.append(_multiply(X1_im, X2_re, clebsch[m1 + l1, m2 + l2]))
        if (l1 + l2 - lambd) % 2 == 1:
            imag_now, real_now = (real_now, _multiply_sequence(imag_now, -1))
        if mu > 0:
            if mu % 2 == 0:
                result[mu + lambd] = _multiply_sequence(real_now, np.sqrt(2))
                result[-mu + lambd] = _multiply_sequence(imag_now, np.sqrt(2))
            else:
                result[mu + lambd] = _multiply_sequence(real_now, -np.sqrt(2))
                result[-mu + lambd] = _multiply_sequence(imag_now, -np.sqrt(2))
        else:
            result[lambd] = real_now
    for i in range(len(result)):
        result[i] = _compress(result[i])
    return result


def get_cg_transformation_rule(l1, l2, l_output):
    check_l_consistency(l1, l2, l_output)
    clebsch = PartialClebschGordan(l1, l2, l_output).values
    indices = get_real_clebsch_gordan(clebsch, l1, l2, l_output)
    m1_aligned, m2_aligned, multipliers, mu_aligned = [], [], [], []
    for mu in range(2 * l_output + 1):
        for el in indices[mu]:
            m1, m2, multiplier = el
            m1_aligned.append(m1)
            m2_aligned.append(m2)
            multipliers.append(multiplier * 1.0)
            mu_aligned.append(mu)
    m1_aligned = np.asarray(m1_aligned, dtype=np.int64)
    m2_aligned = np.asarray(m2_aligned, dtype=np.int64)
    mu_aligned = np.asarray(mu_aligned, dtype=np.int64)
    multipliers = np.asarray(multipliers, dtype=np.float64)
    order = np.argsort(mu_aligned)
    return (m1_aligned[order], m2_aligned[order], mu_aligned[order], multipliers[order])


def build_dense_cg_tensor(l1, l2, l_output):
    """Densify the sparse rule into T[m1, m2, mu] (used only by the reference)."""
    m1, m2, mu, C = get_cg_transformation_rule(l1, l2, l_output)
    T = np.zeros((2 * l1 + 1, 2 * l2 + 1, 2 * l_output + 1), dtype=np.float32)
    for a, b, c, v in zip(m1, m2, mu, C):
        T[a, b, c] += v
    return T


# ----------------------------------------------------------------------------
# Pallas kernel
# ----------------------------------------------------------------------------

_LANES = 128
_CHUNK_ROWS = 16                          # sublane rows per in-kernel loop step
_PAD_QUANTUM = _CHUNK_ROWS * _LANES       # N padded to a multiple of this (2048)
_MAX_TILE_ROWS = 4096                     # hard cap on sublane rows per tile
_VMEM_BLOCK_BUDGET = 24 * 1024 * 1024     # double-buffered block budget (bytes)
_VMEM_LIMIT = 48 * 1024 * 1024            # scoped VMEM limit (<=48 MiB, v7x-safe)
_UNROLL = 4                               # chunk-loop unroll factor


def _round_up(x, m):
    return ((x + m - 1) // m) * m


def _make_cg_kernel(terms_by_mu, mu_dim, chunk_rows, unroll):
    """Kernel with the sparse CG rule baked in as compile-time constants.

    Refs (lane-dense layout):
      x1_ref: [M1, TR, 128], x2_ref: [M2, TR, 128], o_ref: [MU, TR, 128]
    """
    used_a = tuple(sorted({a for terms in terms_by_mu for (a, _, _) in terms}))
    used_b = tuple(sorted({b for terms in terms_by_mu for (_, b, _) in terms}))
    pair_count = Counter((a, b) for terms in terms_by_mu for (a, b, _) in terms)
    shared_pairs = tuple(sorted(p for p, cnt in pair_count.items() if cnt >= 2))

    def kernel(x1_ref, x2_ref, o_ref):
        tile_rows = o_ref.shape[1]              # static
        n_chunks = tile_rows // chunk_rows      # static python int

        def body(ci, carry):
            r0 = pl.multiple_of(ci * chunk_rows, chunk_rows)
            rows = pl.ds(r0, chunk_rows)

            # Hoisted loads: each used m-row loaded exactly once per chunk.
            x1v = {a: x1_ref[a, rows, :].astype(jnp.float32) for a in used_a}
            x2v = {b: x2_ref[b, rows, :].astype(jnp.float32) for b in used_b}
            # Products reused by several output mu's are computed once.
            prods = {p: x1v[p[0]] * x2v[p[1]] for p in shared_pairs}

            for mu in range(mu_dim):
                terms = terms_by_mu[mu]
                if not terms:
                    o_ref[mu, rows, :] = jnp.zeros((chunk_rows, _LANES),
                                                   o_ref.dtype)
                    continue
                acc = None
                for a, b, c in terms:
                    p = prods.get((a, b))
                    if p is None:
                        p = x1v[a] * x2v[b]
                    t = p * c
                    acc = t if acc is None else acc + t
                o_ref[mu, rows, :] = acc.astype(o_ref.dtype)
            return carry

        lax.fori_loop(0, n_chunks, body, 0,
                      unroll=max(1, min(unroll, n_chunks)))

    return kernel


class CGCalculatorSingle:
    """JAX/Pallas equivalent of the torch CGCalculatorSingle module."""

    def __init__(self, l1, l2, l_output, max_tile_rows=None):
        check_l_consistency(l1, l2, l_output)
        self.l1, self.l2, self.l_output = l1, l2, l_output
        self.m1_dim = 2 * l1 + 1
        self.m2_dim = 2 * l2 + 1
        self.mu_dim = 2 * l_output + 1

        # Sparse rule -> per-mu list of (m1_index, m2_index, coefficient).
        m1, m2, mu, C = get_cg_transformation_rule(l1, l2, l_output)
        terms = [[] for _ in range(self.mu_dim)]
        for a, b, c, v in zip(m1, m2, mu, C):
            terms[int(c)].append((int(a), int(b), float(v)))
        self.terms_by_mu = tuple(tuple(t) for t in terms)

        # Dense tensor kept only for the pure-JAX reference check.
        self.cg_dense = jnp.asarray(build_dense_cg_tensor(l1, l2, l_output))

        # Largest tile (sublane rows) whose double-buffered blocks fit budget.
        msum = self.m1_dim + self.m2_dim + self.mu_dim
        bytes_per_row = 2 * msum * _LANES * 4          # x2: double-buffering, f32
        cap = _VMEM_BLOCK_BUDGET // bytes_per_row
        cap = max(_CHUNK_ROWS,
                  min(_MAX_TILE_ROWS, (cap // _CHUNK_ROWS) * _CHUNK_ROWS))
        if max_tile_rows is not None:
            cap = max(_CHUNK_ROWS,
                      (min(cap, max_tile_rows) // _CHUNK_ROWS) * _CHUNK_ROWS)
        self.max_tile_rows = cap

        self._kernel = _make_cg_kernel(self.terms_by_mu, self.mu_dim,
                                       _CHUNK_ROWS, _UNROLL)
        self._forward = jax.jit(self._forward_impl)
        self._forward_lm = jax.jit(self._forward_lane_major_impl)

    # -- tile / launch helpers -------------------------------------------------

    def _pick_tile(self, rows):
        cap = self.max_tile_rows
        steps = pl.cdiv(rows, cap)
        if rows >= 2 * _CHUNK_ROWS:
            steps = max(steps, 2)      # >=2 grid steps -> both v7x TCs busy
        tile = _round_up(pl.cdiv(rows, steps), _CHUNK_ROWS)
        return max(_CHUNK_ROWS, min(tile, cap))

    def _launch(self, x1_3d, x2_3d, rows, out_dtype):
        tile = self._pick_tile(rows)
        grid = (pl.cdiv(rows, tile),)
        return pl.pallas_call(
            self._kernel,
            out_shape=jax.ShapeDtypeStruct((self.mu_dim, rows, _LANES),
                                           out_dtype),
            grid_spec=pltpu.PrefetchScalarGridSpec(
                num_scalar_prefetch=0,
                grid=grid,
                in_specs=[
                    pl.BlockSpec((self.m1_dim, tile, _LANES),
                                 lambda i: (0, i, 0)),
                    pl.BlockSpec((self.m2_dim, tile, _LANES),
                                 lambda i: (0, i, 0)),
                ],
                out_specs=pl.BlockSpec((self.mu_dim, tile, _LANES),
                                       lambda i: (0, i, 0)),
            ),
            compiler_params=pltpu.CompilerParams(
                dimension_semantics=("parallel",),
                vmem_limit_bytes=_VMEM_LIMIT,
            ),
        )(x1_3d, x2_3d)

    # -- torch-layout compat path: X[..., m] ------------------------------------

    def _forward_impl(self, X1, X2):
        lead = X1.shape[:-1]
        n = int(np.prod(lead)) if lead else 1
        if n == 0:
            return jnp.zeros((*lead, self.mu_dim), dtype=X1.dtype)

        # [..., m] -> [m, n]: the big axis becomes the lane axis (one fused
        # transpose(+pad) copy per operand; see forward_lane_major to avoid it).
        x1 = X1.reshape(n, self.m1_dim).T
        x2 = X2.reshape(n, self.m2_dim).T

        n_pad = _round_up(n, _PAD_QUANTUM)
        if n_pad != n:
            x1 = jnp.pad(x1, ((0, 0), (0, n_pad - n)))
            x2 = jnp.pad(x2, ((0, 0), (0, n_pad - n)))

        rows = n_pad // _LANES
        out = self._launch(x1.reshape(self.m1_dim, rows, _LANES),
                           x2.reshape(self.m2_dim, rows, _LANES),
                           rows, X1.dtype)

        out = out.reshape(self.mu_dim, n_pad)
        if n_pad != n:
            out = out[:, :n]
        return out.T.reshape(*lead, self.mu_dim)

    # -- lane-major fast path: X[m, N] (no transpose / copy-free when aligned) --

    def _forward_lane_major_impl(self, x1, x2):
        N = x1.shape[1]
        if N == 0:
            return jnp.zeros((self.mu_dim, 0), dtype=x1.dtype)
        n_pad = _round_up(N, _PAD_QUANTUM)
        if n_pad != N:
            x1 = jnp.pad(x1, ((0, 0), (0, n_pad - N)))
            x2 = jnp.pad(x2, ((0, 0), (0, n_pad - N)))
        rows = n_pad // _LANES
        out = self._launch(x1.reshape(self.m1_dim, rows, _LANES),
                           x2.reshape(self.m2_dim, rows, _LANES),
                           rows, x1.dtype)
        out = out.reshape(self.mu_dim, n_pad)
        return out if n_pad == N else out[:, :N]

    # -- public API --------------------------------------------------------------

    def __call__(self, X1, X2):
        assert X1.shape[:-1] == X2.shape[:-1]
        assert X1.shape[-1] == self.m1_dim and X2.shape[-1] == self.m2_dim
        return self._forward(X1, X2)

    def forward_lane_major(self, X1_mN, X2_mN):
        """Transpose-free path: X1 [m1, N], X2 [m2, N] -> out [mu, N]."""
        assert X1_mN.shape[0] == self.m1_dim and X2_mN.shape[0] == self.m2_dim
        assert X1_mN.shape[1] == X2_mN.shape[1]
        return self._forward_lm(X1_mN, X2_mN)


# Pure-JAX reference implementation of `accumulate` semantics (verification).
def _reference(X1, X2, cg_dense):
    return jnp.einsum("...i,...j,ijk->...k", X1, X2, cg_dense)


if __name__ == "__main__":
    key = jax.random.PRNGKey(0)
    k1, k2, k3, k4, k5, k6, k7, k8 = jax.random.split(key, 8)

    # 1) basic case: l1=l2=1, l_output=2  (m dims: 3, 3, 5), N = 2*64 = 128
    calc = CGCalculatorSingle(1, 1, 2)
    X1 = jax.random.normal(k1, (2, 64, 3), dtype=jnp.float32)
    X2 = jax.random.normal(k2, (2, 64, 3), dtype=jnp.float32)
    out = jax.block_until_ready(calc(X1, X2))
    ref = jax.block_until_ready(_reference(X1, X2, calc.cg_dense))
    assert out.shape == (2, 64, 5)
    assert np.allclose(np.asarray(out), np.asarray(ref), rtol=1e-5, atol=1e-5)

    # 2) different l's, ragged N (3*50 = 150) -> exercises pad + trim path
    calc2 = CGCalculatorSingle(2, 1, 1)
    X1b = jax.random.normal(k3, (3, 50, 5), dtype=jnp.float32)
    X2b = jax.random.normal(k4, (3, 50, 3), dtype=jnp.float32)
    outb = jax.block_until_ready(calc2(X1b, X2b))
    refb = jax.block_until_ready(_reference(X1b, X2b, calc2.cg_dense))
    assert outb.shape == (3, 50, 3)
    assert np.allclose(np.asarray(outb), np.asarray(refb), rtol=1e-5, atol=1e-5)

    # 3) multi-tile grid path (small forced tile -> multi-step grid)
    calc3 = CGCalculatorSingle(1, 1, 2, max_tile_rows=64)
    X1c = jax.random.normal(k5, (2, 12000, 3), dtype=jnp.float32)
    X2c = jax.random.normal(k6, (2, 12000, 3), dtype=jnp.float32)
    outc = jax.block_until_ready(calc3(X1c, X2c))
    refc = jax.block_until_ready(_reference(X1c, X2c, calc3.cg_dense))
    assert outc.shape == (2, 12000, 5)
    assert np.allclose(np.asarray(outc), np.asarray(refc), rtol=1e-5, atol=1e-5)

    # 4) lane-major (transpose-free) fast path, N multiple of 2048 -> copy-free
    X1d = jax.random.normal(k7, (3, 2048), dtype=jnp.float32)
    X2d = jax.random.normal(k8, (3, 2048), dtype=jnp.float32)
    outd = jax.block_until_ready(calc.forward_lane_major(X1d, X2d))
    refd = jnp.einsum("in,jn,ijk->kn", X1d, X2d, calc.cg_dense)
    refd = jax.block_until_ready(refd)
    assert outd.shape == (5, 2048)
    assert np.allclose(np.asarray(outd), np.asarray(refd), rtol=1e-5, atol=1e-5)

    # 5) bf16 I/O (halves HBM traffic; accumulation stays f32 in-kernel)
    out_bf = jax.block_until_ready(calc(X1.astype(jnp.bfloat16),
                                        X2.astype(jnp.bfloat16)))
    ref_bf = _reference(X1.astype(jnp.bfloat16).astype(jnp.float32),
                        X2.astype(jnp.bfloat16).astype(jnp.float32),
                        calc.cg_dense)
    ref_bf = jax.block_until_ready(ref_bf)
    assert out_bf.dtype == jnp.bfloat16
    assert np.allclose(np.asarray(out_bf, dtype=np.float32),
                       np.asarray(ref_bf), rtol=3e-2, atol=3e-2)

    print("KERNEL_OK")
</pallas_src>

<mosaic_0001>
module attributes {stable_mosaic.version = 11 : i64} {
  func.func @kernel(%arg0: i32, %arg1: memref<3x16x128xf32, #tpu.memory_space<vmem>>, %arg2: memref<3x16x128xf32, #tpu.memory_space<vmem>>, %arg3: memref<5x16x128xf32, #tpu.memory_space<vmem>>) attributes {dimension_semantics = [#tpu.dimension_semantics<parallel>], iteration_bounds = array<i64: 1>, scalar_prefetch = 0 : i64, scratch_operands = 0 : i64, tpu.core_type = #tpu.core_type<tc>, window_params = [{transform_indices = @transform_0, window_bounds = array<i64: 3, 16, 128>}, {transform_indices = @transform_1, window_bounds = array<i64: 3, 16, 128>}, {transform_indices = @transform_2, window_bounds = array<i64: 5, 16, 128>}]} {
    %c0_i32 = arith.constant 0 : i32
    %c16_i32 = arith.constant 16 : i32
    %0 = arith.muli %c0_i32, %c16_i32 : i32
    %1 = tpu.assume_multiple %0, 16 : i32
    %c0 = arith.constant 0 : index
    %2 = arith.index_cast %1 : i32 to index
    %c0_0 = arith.constant 0 : index
    %3 = vector.load %arg1[%c0, %2, %c0_0] : memref<3x16x128xf32, #tpu.memory_space<vmem>>, vector<1x16x128xf32>
    %4 = vector.shape_cast %3 : vector<1x16x128xf32> to vector<16x128xf32>
    %c1 = arith.constant 1 : index
    %5 = arith.index_cast %1 : i32 to index
    %c0_1 = arith.constant 0 : index
    %6 = vector.load %arg1[%c1, %5, %c0_1] : memref<3x16x128xf32, #tpu.memory_space<vmem>>, vector<1x16x128xf32>
    %7 = vector.shape_cast %6 : vector<1x16x128xf32> to vector<16x128xf32>
    %c2 = arith.constant 2 : index
    %8 = arith.index_cast %1 : i32 to index
    %c0_2 = arith.constant 0 : index
    %9 = vector.load %arg1[%c2, %8, %c0_2] : memref<3x16x128xf32, #tpu.memory_space<vmem>>, vector<1x16x128xf32>
    %10 = vector.shape_cast %9 : vector<1x16x128xf32> to vector<16x128xf32>
    %c0_3 = arith.constant 0 : index
    %11 = arith.index_cast %1 : i32 to index
    %c0_4 = arith.constant 0 : index
    %12 = vector.load %arg2[%c0_3, %11, %c0_4] : memref<3x16x128xf32, #tpu.memory_space<vmem>>, vector<1x16x128xf32>
    %13 = vector.shape_cast %12 : vector<1x16x128xf32> to vector<16x128xf32>
    %c1_5 = arith.constant 1 : index
    %14 = arith.index_cast %1 : i32 to index
    %c0_6 = arith.constant 0 : index
    %15 = vector.load %arg2[%c1_5, %14, %c0_6] : memref<3x16x128xf32, #tpu.memory_space<vmem>>, vector<1x16x128xf32>
    %16 = vector.shape_cast %15 : vector<1x16x128xf32> to vector<16x128xf32>
    %c2_7 = arith.constant 2 : index
    %17 = arith.index_cast %1 : i32 to index
    %c0_8 = arith.constant 0 : index
    %18 = vector.load %arg2[%c2_7, %17, %c0_8] : memref<3x16x128xf32, #tpu.memory_space<vmem>>, vector<1x16x128xf32>
    %19 = vector.shape_cast %18 : vector<1x16x128xf32> to vector<16x128xf32>
    %20 = arith.mulf %4, %13 : vector<16x128xf32>
    %21 = arith.mulf %10, %19 : vector<16x128xf32>
    %22 = arith.mulf %10, %13 : vector<16x128xf32>
    %cst = arith.constant 0.707106769 : f32
    %23 = vector.broadcast %cst : f32 to vector<16x128xf32>
    %24 = arith.mulf %22, %23 : vector<16x128xf32>
    %25 = arith.mulf %4, %19 : vector<16x128xf32>
    %cst_9 = arith.constant 0.707106769 : f32
    %26 = vector.broadcast %cst_9 : f32 to vector<16x128xf32>
    %27 = arith.mulf %25, %26 : vector<16x128xf32>
    %28 = arith.addf %24, %27 : vector<16x128xf32>
    %c0_10 = arith.constant 0 : index
    %29 = arith.index_cast %1 : i32 to index
    %c0_11 = arith.constant 0 : index
    %30 = vector.load %arg3[%c0_10, %29, %c0_11] : memref<5x16x128xf32, #tpu.memory_space<vmem>>, vector<1x16x128xf32>
    %31 = vector.shape_cast %30 : vector<1x16x128xf32> to vector<16x128xf32>
    %32 = vector.shape_cast %28 : vector<16x128xf32> to vector<1x16x128xf32>
    tpu.vector_store %arg3[%c0_10, %29, %c0_11], %32 {strides = array<i32>} : memref<5x16x128xf32, #tpu.memory_space<vmem>>, vector<1x16x128xf32>,
    %33 = arith.mulf %4, %16 : vector<16x128xf32>
    %cst_12 = arith.constant 0.707106769 : f32
    %34 = vector.broadcast %cst_12 : f32 to vector<16x128xf32>
    %35 = arith.mulf %33, %34 : vector<16x128xf32>
    %36 = arith.mulf %7, %13 : vector<16x128xf32>
    %cst_13 = arith.constant 0.707106769 : f32
    %37 = vector.broadcast %cst_13 : f32 to vector<16x128xf32>
    %38 = arith.mulf %36, %37 : vector<16x128xf32>
    %39 = arith.addf %35, %38 : vector<16x128xf32>
    %c1_14 = arith.constant 1 : index
    %40 = arith.index_cast %1 : i32 to index
    %c0_15 = arith.constant 0 : index
    %41 = vector.load %arg3[%c1_14, %40, %c0_15] : memref<5x16x128xf32, #tpu.memory_space<vmem>>, vector<1x16x128xf32>
    %42 = vector.shape_cast %41 : vector<1x16x128xf32> to vector<16x128xf32>
    %43 = vector.shape_cast %39 : vector<16x128xf32> to vector<1x16x128xf32>
    tpu.vector_store %arg3[%c1_14, %40, %c0_15], %43 {strides = array<i32>} : memref<5x16x128xf32, #tpu.memory_space<vmem>>, vector<1x16x128xf32>,
    %cst_16 = arith.constant -0.408248305 : f32
    %44 = vector.broadcast %cst_16 : f32 to vector<16x128xf32>
    %45 = arith.mulf %21, %44 : vector<16x128xf32>
    %cst_17 = arith.constant -0.408248305 : f32
    %46 = vector.broadcast %cst_17 : f32 to vector<16x128xf32>
    %47 = arith.mulf %20, %46 : vector<16x128xf32>
    %48 = arith.addf %45, %47 : vector<16x128xf32>
    %49 = arith.mulf %7, %16 : vector<16x128xf32>
    %cst_18 = arith.constant 0.816496611 : f32
    %50 = vector.broadcast %cst_18 : f32 to vector<16x128xf32>
    %51 = arith.mulf %49, %50 : vector<16x128xf32>
    %52 = arith.addf %48, %51 : vector<16x128xf32>
    %c2_19 = arith.constant 2 : index
    %53 = arith.index_cast %1 : i32 to index
    %c0_20 = arith.constant 0 : index
    %54 = vector.load %arg3[%c2_19, %53, %c0_20] : memref<5x16x128xf32, #tpu.memory_space<vmem>>, vector<1x16x128xf32>
    %55 = vector.shape_cast %54 : vector<1x16x128xf32> to vector<16x128xf32>
    %56 = vector.shape_cast %52 : vector<16x128xf32> to vector<1x16x128xf32>
    tpu.vector_store %arg3[%c2_19, %53, %c0_20], %56 {strides = array<i32>} : memref<5x16x128xf32, #tpu.memory_space<vmem>>, vector<1x16x128xf32>,
    %57 = arith.mulf %10, %16 : vector<16x128xf32>
    %cst_21 = arith.constant 0.707106769 : f32
    %58 = vector.broadcast %cst_21 : f32 to vector<16x128xf32>
    %59 = arith.mulf %57, %58 : vector<16x128xf32>
    %60 = arith.mulf %7, %19 : vector<16x128xf32>
    %cst_22 = arith.constant 0.707106769 : f32
    %61 = vector.broadcast %cst_22 : f32 to vector<16x128xf32>
    %62 = arith.mulf %60, %61 : vector<16x128xf32>
    %63 = arith.addf %59, %62 : vector<16x128xf32>
    %c3 = arith.constant 3 : index
    %64 = arith.index_cast %1 : i32 to index
    %c0_23 = arith.constant 0 : index
    %65 = vector.load %arg3[%c3, %64, %c0_23] : memref<5x16x128xf32, #tpu.memory_space<vmem>>, vector<1x16x128xf32>
    %66 = vector.shape_cast %65 : vector<1x16x128xf32> to vector<16x128xf32>
    %67 = vector.shape_cast %63 : vector<16x128xf32> to vector<1x16x128xf32>
    tpu.vector_store %arg3[%c3, %64, %c0_23], %67 {strides = array<i32>} : memref<5x16x128xf32, #tpu.memory_space<vmem>>, vector<1x16x128xf32>,
    %cst_24 = arith.constant 0.707106769 : f32
    %68 = vector.broadcast %cst_24 : f32 to vector<16x128xf32>
    %69 = arith.mulf %21, %68 : vector<16x128xf32>
    %cst_25 = arith.constant -0.707106769 : f32
    %70 = vector.broadcast %cst_25 : f32 to vector<16x128xf32>
    %71 = arith.mulf %20, %70 : vector<16x128xf32>
    %72 = arith.addf %69, %71 : vector<16x128xf32>
    %c4 = arith.constant 4 : index
    %73 = arith.index_cast %1 : i32 to index
    %c0_26 = arith.constant 0 : index
    %74 = vector.load %arg3[%c4, %73, %c0_26] : memref<5x16x128xf32, #tpu.memory_space<vmem>>, vector<1x16x128xf32>
    %75 = vector.shape_cast %74 : vector<1x16x128xf32> to vector<16x128xf32>
    %76 = vector.shape_cast %72 : vector<16x128xf32> to vector<1x16x128xf32>
    tpu.vector_store %arg3[%c4, %73, %c0_26], %76 {strides = array<i32>} : memref<5x16x128xf32, #tpu.memory_space<vmem>>, vector<1x16x128xf32>,
    %c1_i32 = arith.constant 1 : i32
    return
  }
  func.func @transform_0(%arg0: i32) -> (i32, i32, i32) {
    %c0_i32 = arith.constant 0 : i32
    %c0_i32_0 = arith.constant 0 : i32
    %c0_i32_1 = arith.constant 0 : i32
    return %c0_i32, %arg0, %c0_i32_0 : i32, i32, i32
  }
  func.func @transform_1(%arg0: i32) -> (i32, i32, i32) {
    %c0_i32 = arith.constant 0 : i32
    %c0_i32_0 = arith.constant 0 : i32
    %c0_i32_1 = arith.constant 0 : i32
    return %c0_i32, %arg0, %c0_i32_0 : i32, i32, i32
  }
  func.func @transform_2(%arg0: i32) -> (i32, i32, i32) {
    %c0_i32 = arith.constant 0 : i32
    %c0_i32_0 = arith.constant 0 : i32
    %c0_i32_1 = arith.constant 0 : i32
    return %c0_i32, %arg0, %c0_i32_0 : i32, i32, i32
  }
}

</mosaic_0001>

<llo_original>
// kernel: _forward_impl.1
$region0: #{_forward_impl.1}
  #allocation0 [shape = 'u32[]', space=smem, size = 0x4, offset = 0x4, fixed_abs, tag = 'smem constant byte address 0x4 - core index']
  #allocation1 [shape = 'u32[144,128]{1,0:T(1,128)}', space=vmem, size = 0x12000, scoped, tag = 'internal scratch']
  %s0 = inlined_call_operand.vmem [shape: f32[3,16,128], index: 0, kind: input, shape index: {}]
  %s1 = inlined_call_operand.vmem [shape: f32[3,16,128], index: 1, kind: input, shape index: {}]
  %s2 = inlined_call_operand.vmem [shape: f32[5,16,128], index: 2, kind: output, shape index: {}]
  %s3 = sld [smem:[#allocation0]]
  $region18: #{_forward_impl.1} parent=0
    _
  %s5 = ssub.s32 1, %s3
  %s6 = scalar_select 0, %s5, %s3
  // Predicated region
  $region2: #{_forward_impl.1} parent=0 // pred_check
    _
  $region3: #{_forward_impl.1} parent=0 // pred_check_branch
    %8 = sbr.rel (0) target = $region5
  $region4: #{_forward_impl.1} parent=0 // pred_region
    _
  $region5: #{_forward_impl.1} parent=0 // pred_fallthru
    _
  // Predicated region
  $region6: #{_forward_impl.1} parent=0 // pred_check
    _
  $region7: #{_forward_impl.1} parent=0 // pred_check_branch
    %10 = sbr.rel (0) target = $region9
  $region8: #{_forward_impl.1} parent=0 // pred_region
    _
  $region9: #{_forward_impl.1} parent=0 // pred_fallthru
    _
  %v11 = vld [vmem:[%s0] sm:$0xff]
  %v12 = vld [vmem:[%s0 + $0x8] sm:$0xff]
  %s13 = sadd.s32 0, 16
  %s14 = scalar_lea.vmem %s0, %s13
  %v15 = vld [vmem:[%s14] sm:$0xff]
  %v16 = vld [vmem:[%s14 + $0x8] sm:$0xff]
  %s17 = sadd.s32 0, 32
  %s18 = scalar_lea.vmem %s0, %s17
  %v19 = vld [vmem:[%s18] sm:$0xff]
  %v20 = vld [vmem:[%s18 + $0x8] sm:$0xff]
  %v21 = vld [vmem:[%s1] sm:$0xff]
  %v22 = vld [vmem:[%s1 + $0x8] sm:$0xff]
  %s23 = scalar_lea.vmem %s1, %s13
  %v24 = vld [vmem:[%s23] sm:$0xff]
  %v25 = vld [vmem:[%s23 + $0x8] sm:$0xff]
  %s26 = scalar_lea.vmem %s1, %s17
  %v27 = vld [vmem:[%s26] sm:$0xff]
  %v28 = vld [vmem:[%s26 + $0x8] sm:$0xff]
  %v29 = vmul.f32 %v11, %v21
  %v30 = vmul.f32 %v12, %v22
  %v31 = vmul.f32 %v19, %v27
  %v32 = vmul.f32 %v20, %v28
  %v33 = vmul.f32 %v19, %v21
  %v34 = vmul.f32 %v20, %v22
  %v35 = vmul.f32 %v33, 0.70710677
  %v36 = vmul.f32 %v34, 0.70710677
  %v37 = vmul.f32 %v11, %v27
  %v38 = vmul.f32 %v12, %v28
  %v39 = vmul.f32 %v37, 0.70710677
  %v40 = vmul.f32 %v38, 0.70710677
  %v41 = vadd.f32 %v35, %v39
  %v42 = vadd.f32 %v36, %v40
  %43 = vst [vmem:[%s2] sm:$0xff] %v41
  %44 = vst [vmem:[%s2 + $0x8] sm:$0xff] %v42
  %v45 = vmul.f32 %v11, %v24
  %v46 = vmul.f32 %v12, %v25
  %v47 = vmul.f32 %v45, 0.70710677
  %v48 = vmul.f32 %v46, 0.70710677
  %v49 = vmul.f32 %v15, %v21
  %v50 = vmul.f32 %v16, %v22
  %v51 = vmul.f32 %v49, 0.70710677
  %v52 = vmul.f32 %v50, 0.70710677
  %v53 = vadd.f32 %v47, %v51
  %v54 = vadd.f32 %v48, %v52
  %s55 = scalar_lea.vmem %s2, %s13
  %56 = vst [vmem:[%s55] sm:$0xff] %v53
  %57 = vst [vmem:[%s55 + $0x8] sm:$0xff] %v54
  %v58 = vmul.f32 %v31, -0.4082483
  %v59 = vmul.f32 %v32, -0.4082483
  %v60 = vmul.f32 %v29, -0.4082483
  %v61 = vmul.f32 %v30, -0.4082483
  %v62 = vadd.f32 %v58, %v60
  %v63 = vadd.f32 %v59, %v61
  %v64 = vmul.f32 %v15, %v24
  %v65 = vmul.f32 %v16, %v25
  %v66 = vmul.f32 %v64, 0.8164966
  %v67 = vmul.f32 %v65, 0.8164966
  %v68 = vadd.f32 %v62, %v66
  %v69 = vadd.f32 %v63, %v67
  %s70 = scalar_lea.vmem %s2, %s17
  %71 = vst [vmem:[%s70] sm:$0xff] %v68
  %72 = vst [vmem:[%s70 + $0x8] sm:$0xff] %v69
  %v73 = vmul.f32 %v19, %v24
  %v74 = vmul.f32 %v20, %v25
  %v75 = vmul.f32 %v73, 0.70710677
  %v76 = vmul.f32 %v74, 0.70710677
  %v77 = vmul.f32 %v15, %v27
  %v78 = vmul.f32 %v16, %v28
  %v79 = vmul.f32 %v77, 0.70710677
  %v80 = vmul.f32 %v78, 0.70710677
  %v81 = vadd.f32 %v75, %v79
  %v82 = vadd.f32 %v76, %v80
  %s83 = sadd.s32 0, 48
  %s84 = scalar_lea.vmem %s2, %s83
  %85 = vst [vmem:[%s84] sm:$0xff] %v81
  %86 = vst [vmem:[%s84 + $0x8] sm:$0xff] %v82
  %v87 = vmul.f32 %v31, 0.70710677
  %v88 = vmul.f32 %v32, 0.70710677
  %v89 = vmul.f32 %v29, -0.70710677
  %v90 = vmul.f32 %v30, -0.70710677
  %v91 = vadd.f32 %v87, %v89
  %v92 = vadd.f32 %v88, %v90
  %s93 = sadd.s32 0, 64
  %s94 = scalar_lea.vmem %s2, %s93
  %95 = vst [vmem:[%s94] sm:$0xff] %v91
  %96 = vst [vmem:[%s94 + $0x8] sm:$0xff] %v92
  // Predicated region
  $region10: #{_forward_impl.1} parent=0 // pred_check
    _
  $region11: #{_forward_impl.1} parent=0 // pred_check_branch
    %98 = sbr.rel (0) target = $region13
  $region12: #{_forward_impl.1} parent=0 // pred_region
    _
  $region13: #{_forward_impl.1} parent=0 // pred_fallthru
    _
  // Predicated region
  $region14: #{_forward_impl.1} parent=0 // pred_check
    _
  $region15: #{_forward_impl.1} parent=0 // pred_check_branch
    %100 = sbr.rel (0) target = $region17
  $region16: #{_forward_impl.1} parent=0 // pred_region
    _
  $region17: #{_forward_impl.1} parent=0 // pred_fallthru
    _

</llo_original>
